<compile_context>
chip_gen: v5e
topology: v5e:2x2
jax: 0.10.0
libtpu: 0.0.40
codegen_flags: <defaults>
</compile_context>

<pallas_src>
import jax
import jax.numpy as jnp
from jax import lax
from jax.experimental import pallas as pl
from jax.experimental.pallas import tpu as pltpu


def _soft_select_attention_kernel(q_ref, s_ref, o_ref):
    q = q_ref[...]                      # [tile_b, dim], native dtype (bf16/f32)
    s = s_ref[...]                      # [few,   dim], native dtype

    few, dim = s.shape
    scale = float(dim) ** -0.5

    # score[b, f] = sum_d q[b, d] * s[f, d]  -- contract last dims of both
    # operands directly; MXU matmul with f32 accumulation.
    score = lax.dot_general(
        q, s,
        dimension_numbers=(((1,), (1,)), ((), ())),
        preferred_element_type=jnp.float32,
    ) * scale                                                   # [tile_b, few] f32

    # Numerically-stable softmax over `few` (axis=1), all in f32.
    m = jnp.max(score, axis=1, keepdims=True)
    e = jnp.exp(score - m)
    denom = jnp.sum(e, axis=1, keepdims=True)
    att = e * pl.reciprocal(denom, approx=True)                 # [tile_b, few] f32

    if few <= 16:
        # Tiny contraction: unrolled VPU weighted sum instead of an
        # almost-empty MXU matmul.  `few` is a compile-time constant, so this
        # Python loop fully unrolls at trace time.
        s_f32 = s.astype(jnp.float32)
        center = att[:, 0:1] * s_f32[0:1, :]
        for f in range(1, few):
            center = center + att[:, f:f + 1] * s_f32[f:f + 1, :]
    else:
        # center = att @ support (MXU, native-dtype in / f32 accumulate).
        center = jnp.dot(att.astype(s.dtype), s,
                         preferred_element_type=jnp.float32)    # [tile_b, dim] f32

    o_ref[...] = center.astype(o_ref.dtype)


def soft_select_attention(support: jax.Array, query: jax.Array,
                          *, tile_b: int | None = None) -> jax.Array:
    """support: [few, dim], query: [batch, dim] -> center: [batch, dim]"""
    batch, dim = query.shape
    few, dim_s = support.shape
    assert dim == dim_s, "support/query feature dims must match"

    # Pad batch to a multiple of 8 so blocks satisfy the (8, 128) constraint.
    pad_b = (-batch) % 8
    padded_batch = batch + pad_b
    q_in = query if pad_b == 0 else jnp.pad(query, ((0, pad_b), (0, 0)))

    if tile_b is None:
        # Largest batch tile (multiple of 8) dividing padded_batch, capped so
        # 2x double-buffered query tile + 2x output tile + resident support
        # stay comfortably inside the v7x 64 MiB VMEM budget.
        tile_b = padded_batch
        for cand in (512, 256, 128, 64, 32, 16, 8):
            if padded_batch % cand == 0:
                tile_b = cand
                break
    assert padded_batch % tile_b == 0, "tile_b must divide (padded) batch"
    grid = (padded_batch // tile_b,)

    out = pl.pallas_call(
        _soft_select_attention_kernel,
        out_shape=jax.ShapeDtypeStruct((padded_batch, dim), query.dtype),
        grid_spec=pltpu.PrefetchScalarGridSpec(
            num_scalar_prefetch=0,
            grid=grid,
            in_specs=[
                # query: tiled over batch -> software-pipelined HBM<->VMEM.
                pl.BlockSpec((tile_b, dim), lambda i: (i, 0)),
                # support: constant block index -> fetched once, stays resident.
                pl.BlockSpec((few, dim), lambda i: (0, 0)),
            ],
            out_specs=pl.BlockSpec((tile_b, dim), lambda i: (i, 0)),
        ),
        compiler_params=pltpu.CompilerParams(
            # Batch axis is independent work -> megacore-shardable (v7x 2 TCs).
            dimension_semantics=("parallel",),
        ),
    )(q_in, support)

    return out if pad_b == 0 else out[:batch]


def _reference(support, query):
    scale = support.shape[1] ** (-0.5)
    score = (query[:, None, :] * support[None, :, :]).sum(axis=2) * scale
    att = jax.nn.softmax(score, axis=1)
    return att @ support


if __name__ == "__main__":
    # SoftSelectAttention has no learned parameters, so only inputs are needed.
    key = jax.random.PRNGKey(0)
    k_sup, k_qry = jax.random.split(key)

    # dim chosen as a multiple of 128 for a lane-dense output (unmasked vst);
    # batch tiled in multiples of 8 across a 1-D "parallel" grid.
    few, batch, dim = 8, 16, 128
    support = jax.random.normal(k_sup, (few, dim), dtype=jnp.float32)
    query = jax.random.normal(k_qry, (batch, dim), dtype=jnp.float32)

    center = soft_select_attention(support, query, tile_b=8)
    center = jax.block_until_ready(center)

    ref = _reference(support, query)
    assert center.shape == (batch, dim)
    # Tolerance accommodates the EUP approximate reciprocal in the softmax
    # normalizer.
    assert jnp.allclose(center, ref, atol=1e-2, rtol=1e-2), "mismatch vs reference"

    print("KERNEL_OK")
</pallas_src>

<mosaic_0001>
module attributes {stable_mosaic.version = 11 : i64} {
  func.func @_soft_select_attention_kernel(%arg0: i32, %arg1: memref<8x128xf32, #tpu.memory_space<vmem>>, %arg2: memref<8x128xf32, #tpu.memory_space<vmem>>, %arg3: memref<8x128xf32, #tpu.memory_space<vmem>>) attributes {dimension_semantics = [#tpu.dimension_semantics<parallel>], iteration_bounds = array<i64: 2>, scalar_prefetch = 0 : i64, scratch_operands = 0 : i64, tpu.core_type = #tpu.core_type<tc>, window_params = [{transform_indices = @transform_0, window_bounds = array<i64: 8, 128>}, {pipeline_mode = #tpu.pipeline_mode<synchronous>, transform_indices = @transform_1, window_bounds = array<i64: 8, 128>}, {transform_indices = @transform_2, window_bounds = array<i64: 8, 128>}]} {
    %c0 = arith.constant 0 : index
    %c0_0 = arith.constant 0 : index
    %0 = vector.load %arg1[%c0, %c0_0] : memref<8x128xf32, #tpu.memory_space<vmem>>, vector<8x128xf32>
    %c0_1 = arith.constant 0 : index
    %c0_2 = arith.constant 0 : index
    %1 = vector.load %arg2[%c0_1, %c0_2] : memref<8x128xf32, #tpu.memory_space<vmem>>, vector<8x128xf32>
    %cst = arith.constant dense<0.000000e+00> : vector<8x8xf32>
    %2 = tpu.matmul %0, %1, %cst {dimension_numbers = #tpu.dot_dimension_numbers<[1], [1], [0], [0], [0, 0, 1, 0], [], []>} : vector<8x128xf32>, vector<8x128xf32>, vector<8x8xf32> -> vector<8x8xf32>
    %cst_3 = arith.constant 0.0883883461 : f32
    %3 = vector.broadcast %cst_3 : f32 to vector<8x8xf32>
    %4 = arith.mulf %2, %3 : vector<8x8xf32>
    %cst_4 = arith.constant dense<0xFF800000> : vector<8xf32>
    %5 = vector.multi_reduction <maximumf>, %4, %cst_4 [1] : vector<8x8xf32> to vector<8xf32>
    %6 = vector.shape_cast %5 : vector<8xf32> to vector<8x1xf32>
    %7 = vector.broadcast %6 : vector<8x1xf32> to vector<8x8xf32>
    %8 = arith.subf %4, %7 : vector<8x8xf32>
    %9 = math.exp %8 : vector<8x8xf32>
    %cst_5 = arith.constant dense<0.000000e+00> : vector<8xf32>
    %10 = vector.multi_reduction <add>, %9, %cst_5 [1] : vector<8x8xf32> to vector<8xf32>
    %11 = vector.shape_cast %10 : vector<8xf32> to vector<8x1xf32>
    %12 = tpu.reciprocal %11 {approx = true} : vector<8x1xf32> -> vector<8x1xf32>
    %13 = vector.broadcast %12 : vector<8x1xf32> to vector<8x8xf32>
    %14 = arith.mulf %9, %13 : vector<8x8xf32>
    %15 = vector.extract_strided_slice %14 {offsets = [0, 0], sizes = [8, 1], strides = [1, 1]} : vector<8x8xf32> to vector<8x1xf32>
    %16 = vector.extract_strided_slice %1 {offsets = [0, 0], sizes = [1, 128], strides = [1, 1]} : vector<8x128xf32> to vector<1x128xf32>
    %17 = vector.broadcast %15 : vector<8x1xf32> to vector<8x128xf32>
    %18 = vector.broadcast %16 : vector<1x128xf32> to vector<8x128xf32>
    %19 = arith.mulf %17, %18 : vector<8x128xf32>
    %20 = vector.extract_strided_slice %14 {offsets = [0, 1], sizes = [8, 1], strides = [1, 1]} : vector<8x8xf32> to vector<8x1xf32>
    %21 = vector.extract_strided_slice %1 {offsets = [1, 0], sizes = [1, 128], strides = [1, 1]} : vector<8x128xf32> to vector<1x128xf32>
    %22 = vector.broadcast %20 : vector<8x1xf32> to vector<8x128xf32>
    %23 = vector.broadcast %21 : vector<1x128xf32> to vector<8x128xf32>
    %24 = arith.mulf %22, %23 : vector<8x128xf32>
    %25 = arith.addf %19, %24 : vector<8x128xf32>
    %26 = vector.extract_strided_slice %14 {offsets = [0, 2], sizes = [8, 1], strides = [1, 1]} : vector<8x8xf32> to vector<8x1xf32>
    %27 = vector.extract_strided_slice %1 {offsets = [2, 0], sizes = [1, 128], strides = [1, 1]} : vector<8x128xf32> to vector<1x128xf32>
    %28 = vector.broadcast %26 : vector<8x1xf32> to vector<8x128xf32>
    %29 = vector.broadcast %27 : vector<1x128xf32> to vector<8x128xf32>
    %30 = arith.mulf %28, %29 : vector<8x128xf32>
    %31 = arith.addf %25, %30 : vector<8x128xf32>
    %32 = vector.extract_strided_slice %14 {offsets = [0, 3], sizes = [8, 1], strides = [1, 1]} : vector<8x8xf32> to vector<8x1xf32>
    %33 = vector.extract_strided_slice %1 {offsets = [3, 0], sizes = [1, 128], strides = [1, 1]} : vector<8x128xf32> to vector<1x128xf32>
    %34 = vector.broadcast %32 : vector<8x1xf32> to vector<8x128xf32>
    %35 = vector.broadcast %33 : vector<1x128xf32> to vector<8x128xf32>
    %36 = arith.mulf %34, %35 : vector<8x128xf32>
    %37 = arith.addf %31, %36 : vector<8x128xf32>
    %38 = vector.extract_strided_slice %14 {offsets = [0, 4], sizes = [8, 1], strides = [1, 1]} : vector<8x8xf32> to vector<8x1xf32>
    %39 = vector.extract_strided_slice %1 {offsets = [4, 0], sizes = [1, 128], strides = [1, 1]} : vector<8x128xf32> to vector<1x128xf32>
    %40 = vector.broadcast %38 : vector<8x1xf32> to vector<8x128xf32>
    %41 = vector.broadcast %39 : vector<1x128xf32> to vector<8x128xf32>
    %42 = arith.mulf %40, %41 : vector<8x128xf32>
    %43 = arith.addf %37, %42 : vector<8x128xf32>
    %44 = vector.extract_strided_slice %14 {offsets = [0, 5], sizes = [8, 1], strides = [1, 1]} : vector<8x8xf32> to vector<8x1xf32>
    %45 = vector.extract_strided_slice %1 {offsets = [5, 0], sizes = [1, 128], strides = [1, 1]} : vector<8x128xf32> to vector<1x128xf32>
    %46 = vector.broadcast %44 : vector<8x1xf32> to vector<8x128xf32>
    %47 = vector.broadcast %45 : vector<1x128xf32> to vector<8x128xf32>
    %48 = arith.mulf %46, %47 : vector<8x128xf32>
    %49 = arith.addf %43, %48 : vector<8x128xf32>
    %50 = vector.extract_strided_slice %14 {offsets = [0, 6], sizes = [8, 1], strides = [1, 1]} : vector<8x8xf32> to vector<8x1xf32>
    %51 = vector.extract_strided_slice %1 {offsets = [6, 0], sizes = [1, 128], strides = [1, 1]} : vector<8x128xf32> to vector<1x128xf32>
    %52 = vector.broadcast %50 : vector<8x1xf32> to vector<8x128xf32>
    %53 = vector.broadcast %51 : vector<1x128xf32> to vector<8x128xf32>
    %54 = arith.mulf %52, %53 : vector<8x128xf32>
    %55 = arith.addf %49, %54 : vector<8x128xf32>
    %56 = vector.extract_strided_slice %14 {offsets = [0, 7], sizes = [8, 1], strides = [1, 1]} : vector<8x8xf32> to vector<8x1xf32>
    %57 = vector.extract_strided_slice %1 {offsets = [7, 0], sizes = [1, 128], strides = [1, 1]} : vector<8x128xf32> to vector<1x128xf32>
    %58 = vector.broadcast %56 : vector<8x1xf32> to vector<8x128xf32>
    %59 = vector.broadcast %57 : vector<1x128xf32> to vector<8x128xf32>
    %60 = arith.mulf %58, %59 : vector<8x128xf32>
    %61 = arith.addf %55, %60 : vector<8x128xf32>
    %c0_6 = arith.constant 0 : index
    %c0_7 = arith.constant 0 : index
    %62 = vector.load %arg3[%c0_6, %c0_7] : memref<8x128xf32, #tpu.memory_space<vmem>>, vector<8x128xf32>
    tpu.vector_store %arg3[%c0_6, %c0_7], %61 {strides = array<i32>} : memref<8x128xf32, #tpu.memory_space<vmem>>, vector<8x128xf32>,
    return
  }
  func.func @transform_0(%arg0: i32) -> (i32, i32) {
    %c0_i32 = arith.constant 0 : i32
    %c0_i32_0 = arith.constant 0 : i32
    return %arg0, %c0_i32 : i32, i32
  }
  func.func @transform_1(%arg0: i32) -> (i32, i32) {
    %c0_i32 = arith.constant 0 : i32
    %c0_i32_0 = arith.constant 0 : i32
    %c0_i32_1 = arith.constant 0 : i32
    return %c0_i32, %c0_i32_0 : i32, i32
  }
  func.func @transform_2(%arg0: i32) -> (i32, i32) {
    %c0_i32 = arith.constant 0 : i32
    %c0_i32_0 = arith.constant 0 : i32
    return %arg0, %c0_i32 : i32, i32
  }
}

</mosaic_0001>

<llo_original>
// kernel: tpu_custom_call.1
$region0: #{tpu_custom_call.1}
  #allocation0 [shape = 'u32[]', space=smem, size = 0x4, offset = 0x4, fixed_abs, tag = 'smem constant byte address 0x4 - core index']
  #allocation1 [shape = 'u32[72,128]{1,0:T(1,128)}', space=vmem, size = 0x9000, scoped, tag = 'internal scratch']
  %s0 = inlined_call_operand.hbm [shape: f32[16,128], index: 0, kind: input, shape index: {}]
  %s1 = inlined_call_operand.hbm [shape: f32[8,128], index: 1, kind: input, shape index: {}]
  %s2 = inlined_call_operand.hbm [shape: f32[16,128], index: 2, kind: output, shape index: {}]
  %s3 = sld [smem:[#allocation0]]
  $region49: #{tpu_custom_call.1} parent=0
    _
  %s5 = ssub.s32 1, %s3
  %s6 = scalar_select 0, %s5, %s3
  $region1: #{tpu_custom_call.1} parent=0
    #allocation2 [shape = 'u8[8192]{0}', space=vmem, size = 0x2000, scoped, tag = 'input window, operand 0']
    #allocation3 [shape = 's32[2]{0}', space=sflag, size = 0x8, scoped, tag = 'scoped memory for tpu_custom_call.1']
    #allocation4 [shape = 's32[2]{0}', space=sflag, size = 0x8, scoped, tag = 'scoped memory for tpu_custom_call.1']
    #allocation5 [shape = 'u8[4096]{0}', space=vmem, size = 0x1000, scoped, tag = 'input window, operand 1, single buffered']
    #allocation6 [shape = 's32[1]{0}', space=sflag, size = 0x4, scoped, tag = 'scoped memory for tpu_custom_call.1']
    #allocation7 [shape = 'u8[8192]{0}', space=vmem, size = 0x2000, scoped, tag = 'output window, operand 0']
    %7 = vsyncpa [#allocation3], 0
    %s8 = scalar_lea.sflag [#allocation3], 1
    %9 = vsyncpa %s8, 0
    %10 = vsyncpa [#allocation6], 0
    %11 = vsyncpa [#allocation4], 0
    %s12 = scalar_lea.sflag [#allocation4], 1
    %13 = vsyncpa %s12, 0
    loop: start=0, step=1, limit=4
    $region2: #{tpu_custom_call.1} parent=1 // loop_pre_header
      _
    $region3: #{tpu_custom_call.1} parent=1 // loop_header
      %s15 = sphi 0, %s19
      %p16 = scmp.ge.s32.totalorder %s15, 4
      %s25 = sphi 0, %s27
      %s28 = sphi 0, %s25
      %s29 = sphi 0, %s28
      %s45 = sphi 0, %s29
      %s49 = sphi 0, %s49
      %s51 = sphi 0, %s49
      %s52 = sphi 0, %s51
      %s66 = sphi 0, %s52
      %s72 = sphi 0, %s74
      %s75 = sphi 0, %s72
      %s76 = sphi 0, %s75
      %s92 = sphi 0, %s76
    $region4: #{tpu_custom_call.1} parent=1 // loop_header_branch
      %18 = sbr.rel (%p16) target = $region8
    $region5: #{tpu_custom_call.1} parent=1 // loop_body
      %s20 = ssub.s32 %s15, 1
      %s21 = ssub.s32 %s15, 2
      %s22 = sadd.s32 %s15, 1
      %s23 = ssub.s32 %s15, %s22
      %p24 = scmp.eq.s32.totalorder %s23, 0
      %s26 = sadd.s32 %s25, 1
      %s27 = scalar_select %p24, %s25, %s26
      %p30 = pneg %p24
      %p31 = scmp.eq.s32.totalorder %s15, 1
      %p32 = por %p30, %p31
      %p33 = scmp.ne.s32.totalorder %s25, %s28
      %p34 = scmp.eq.s32.totalorder %s15, 0
      %p35 = por %p33, %p34
      %p36 = scmp.ne.s32.totalorder %s25, %s28
      %p37 = scmp.eq.s32.totalorder %s20, 1
      %p38 = por %p36, %p37
      %p39 = scmp.ne.s32.totalorder %s28, %s29
      %p40 = scmp.eq.s32.totalorder %s20, 0
      %p41 = por %p39, %p40
      %p42 = scmp.ne.s32.totalorder %s28, %s29
      %p43 = scmp.eq.s32.totalorder %s21, 1
      %p44 = por %p42, %p43
      %p46 = scmp.ne.s32.totalorder %s29, %s45
      %p47 = scmp.eq.s32.totalorder %s21, 0
      %p48 = por %p46, %p47
      %s50 = sadd.s32 %s49, 1
      %p53 = scmp.eq.s32.totalorder %s15, 1
      %p54 = scmp.ne.s32.totalorder %s49, %s51
      %p55 = scmp.eq.s32.totalorder %s15, 0
      %p56 = por %p54, %p55
      %p57 = scmp.ne.s32.totalorder %s49, %s51
      %p58 = scmp.eq.s32.totalorder %s20, 1
      %p59 = por %p57, %p58
      %p60 = scmp.ne.s32.totalorder %s51, %s52
      %p61 = scmp.eq.s32.totalorder %s20, 0
      %p62 = por %p60, %p61
      %p63 = scmp.ne.s32.totalorder %s51, %s52
      %p64 = scmp.eq.s32.totalorder %s21, 1
      %p65 = por %p63, %p64
      %p67 = scmp.ne.s32.totalorder %s52, %s66
      %p68 = scmp.eq.s32.totalorder %s21, 0
      %p69 = por %p67, %p68
      %s70 = ssub.s32 %s15, %s22
      %p71 = scmp.eq.s32.totalorder %s70, 0
      %s73 = sadd.s32 %s72, 1
      %s74 = scalar_select %p71, %s72, %s73
      %p77 = pneg %p71
      %p78 = scmp.eq.s32.totalorder %s15, 1
      %p79 = por %p77, %p78
      %p80 = scmp.ne.s32.totalorder %s72, %s75
      %p81 = scmp.eq.s32.totalorder %s15, 0
      %p82 = por %p80, %p81
      %p83 = scmp.ne.s32.totalorder %s72, %s75
      %p84 = scmp.eq.s32.totalorder %s20, 1
      %p85 = por %p83, %p84
      %p86 = scmp.ne.s32.totalorder %s75, %s76
      %p87 = scmp.eq.s32.totalorder %s20, 0
      %p88 = por %p86, %p87
      %p89 = scmp.ne.s32.totalorder %s75, %s76
      %p90 = scmp.eq.s32.totalorder %s21, 1
      %p91 = por %p89, %p90
      %p93 = scmp.ne.s32.totalorder %s76, %s92
      %p94 = scmp.eq.s32.totalorder %s21, 0
      %p95 = por %p93, %p94
      %p96 = scmp.le.s32.totalorder 1, %s15
      %p97 = scmp.lt.s32.totalorder %s15, 3
      %p98 = pnand %p96, %p97
      %p99 = pneg %p98
      // Predicated region
      $region9: #{tpu_custom_call.1} parent=5 // pred_check
        _
      $region10: #{tpu_custom_call.1} parent=5 // pred_check_branch
        %101 = sbr.rel (%p98) target = $region12
      $region11: #{tpu_custom_call.1} parent=5 // pred_region
        %s102 = ssub.s32 %s15, 1
        // Predicated region
        $region13: #{tpu_custom_call.1} parent=11 // pred_check
          %p103 = pneg %p62
        $region14: #{tpu_custom_call.1} parent=11 // pred_check_branch
          %105 = sbr.rel (%p103) target = $region16
        $region15: #{tpu_custom_call.1} parent=11 // pred_region
          %107 = vsyncadd [#allocation6], 0
          %s109 = sshll.u32 %s1, 4
          %s110 = int_to_ptr.hbm [resolvable:$true] %s109
          %s111 = sshll.u32 [#allocation5], 4
          %s112 = int_to_ptr.vmem [resolvable:$true] %s111
          %114 = dma.hbm_to_vmem [thread:$0]  %s110, 128, %s112, [#allocation6]
        $region16: #{tpu_custom_call.1} parent=11 // pred_fallthru
          _
      $region12: #{tpu_custom_call.1} parent=5 // pred_fallthru
        _
      %p115 = scmp.lt.s32.totalorder %s15, 2
      // Predicated region
      $region17: #{tpu_custom_call.1} parent=5 // pred_check
        %p116 = pneg %p115
      $region18: #{tpu_custom_call.1} parent=5 // pred_check_branch
        %118 = sbr.rel (%p116) target = $region20
      $region19: #{tpu_custom_call.1} parent=5 // pred_region
        // Predicated region
        $region21: #{tpu_custom_call.1} parent=19 // pred_check
          %p119 = pneg %p35
        $region22: #{tpu_custom_call.1} parent=19 // pred_check_branch
          %121 = sbr.rel (%p119) target = $region24
        $region23: #{tpu_custom_call.1} parent=19 // pred_region
          %s122 = sand.u32 %s25, 1
          %s123 = scalar_lea.sflag [#allocation3], %s122
          %s124 = sand.u32 %s25, 1
          %s125 = smul.addr %s124, 8
          %s126 = scalar_lea.vmem [#allocation2], %s125
          %128 = vsyncadd %s123, 0
          %s129 = smul.addr %s15, 8
          %s130 = scalar_lea.hbm %s0, %s129
          %s132 = sshll.u32 %s130, 4
          %s133 = int_to_ptr.hbm [resolvable:$true] %s132
          %s134 = sshll.u32 %s126, 4
          %s135 = int_to_ptr.vmem [resolvable:$true] %s134
          %137 = dma.hbm_to_vmem [thread:$0]  %s133, 128, %s135, %s123
        $region24: #{tpu_custom_call.1} parent=19 // pred_fallthru
          _
      $region20: #{tpu_custom_call.1} parent=5 // pred_fallthru
        _
      %p138 = scmp.le.s32.totalorder 1, %s15
      %p139 = scmp.lt.s32.totalorder %s15, 3
      %p140 = pnand %p138, %p139
      %p141 = pneg %p140
      // Predicated region
      $region25: #{tpu_custom_call.1} parent=5 // pred_check
        _
      $region26: #{tpu_custom_call.1} parent=5 // pred_check_branch
        %143 = sbr.rel (%p140) target = $region28
      $region27: #{tpu_custom_call.1} parent=5 // pred_region
        %s144 = ssub.s32 %s15, 1
        %s145 = sand.u32 %s28, 1
        %s146 = scalar_lea.sflag [#allocation3], %s145
        %s147 = sand.u32 %s28, 1
        %s148 = smul.addr %s147, 8
        %s149 = scalar_lea.vmem [#allocation2], %s148
        // Predicated region
        $region29: #{tpu_custom_call.1} parent=27 // pred_check
          %p150 = pneg %p41
        $region30: #{tpu_custom_call.1} parent=27 // pred_check_branch
          %152 = sbr.rel (%p150) target = $region32
        $region31: #{tpu_custom_call.1} parent=27 // pred_region
          %154 = dma.done %s146, 128
        $region32: #{tpu_custom_call.1} parent=27 // pred_fallthru
          _
        // Predicated region
        $region33: #{tpu_custom_call.1} parent=27 // pred_check
          %p155 = pneg %p62
        $region34: #{tpu_custom_call.1} parent=27 // pred_check_branch
          %157 = sbr.rel (%p155) target = $region36
        $region35: #{tpu_custom_call.1} parent=27 // pred_region
          %159 = dma.done [#allocation6], 128
        $region36: #{tpu_custom_call.1} parent=27 // pred_fallthru
          _
        %s160 = sand.u32 %s28, 1
        %s161 = scalar_lea.sflag [#allocation3], %s160
        %s162 = sand.u32 %s28, 1
        %s163 = smul.addr %s162, 8
        %s164 = scalar_lea.vmem [#allocation2], %s163
        %p165 = pneg %p41
        %p166 = pneg %p38
        %p167 = pneg %p62
        %p168 = pneg %p59
        %p169 = pneg %p88
        %p170 = pneg %p85
        %s171 = sand.u32 %s75, 1
        %s172 = scalar_lea.sflag [#allocation4], %s171
        %s173 = sand.u32 %s75, 1
        %s174 = smul.addr %s173, 8
        %s175 = scalar_lea.vmem [#allocation7], %s174
        %v176 = vld [vmem:[%s149] sm:$0xff]
        %v177 = vld [vmem:[#allocation5] sm:$0xff]
        %178 = vmatpush.xpose.msra.mxu0 0.0
        %179 = vmatpush.xpose.msra.mxu0 0.0
        %180 = vmatpush.xpose.msra.mxu0 0.0
        %181 = vmatpush.xpose.msra.mxu0 0.0
        %182 = vmatpush.xpose.msra.mxu0 0.0
        %183 = vmatpush.xpose.msra.mxu0 0.0
        %184 = vmatpush.xpose.msra.mxu0 0.0
        %185 = vmatpush.xpose.msra.mxu0 0.0
        %186 = vmatpush.xpose.msra.mxu0 0.0
        %187 = vmatpush.xpose.msra.mxu0 0.0
        %188 = vmatpush.xpose.msra.mxu0 0.0
        %189 = vmatpush.xpose.msra.mxu0 0.0
        %190 = vmatpush.xpose.msra.mxu0 0.0
        %191 = vmatpush.xpose.msra.mxu0 0.0
        %192 = vmatpush.xpose.msra.mxu0 0.0
        %193 = vmatpush.xpose.msra.mxu0 %v177
        %194 = vmatmul.f32.gmra.mxu0 %v176
        %v195 = vpop.f32.mrf.mxu0
        %v196 = vadd.f32 0.0, %v195
        %197 = vdwg.mxu0
        %v198 = vmul.f32 %v196, 0.088388346
        %vm199 = vcmask 64512
        %v200 = vsel %vm199, %v198, -inf
        %201 = vmax.xlane.f32.xlu0 %v200
        %v202 = vpop.xlane.xlu0 %201
        %v203 = vsub.f32 %v198, %v202
        %v204 = vmul.f32 %v203, 1.442695
        %v205 = vpow.pop %v204
        %v206 = vsel %vm199, %v205, 0.0
        %207 = vadd.xlane.f32.xlu0 %v206
        %v208 = vpop.xlane.xlu0 %207
        %v209 = vrcp.pop %v208
        %v210 = vmul.f32 %v205, %v209
        %212 = vset.pattern.permute.xlu0 0
        %213 = vperm.xlu0 %212, %v210
        %v214 = vpop.permute.xlu0 %213
        %v216 = vperm.slane %v177, 0
        %v217 = vmul.f32 %v214, %v216
        %218 = vset.pattern.permute.xlu0 1
        %219 = vperm.xlu0 %218, %v210
        %v220 = vpop.permute.xlu0 %219
        %v222 = vperm.slane %v177, 1
        %v223 = vmul.f32 %v220, %v222
        %v224 = vadd.f32 %v217, %v223
        %225 = vset.pattern.permute.xlu0 2
        %226 = vperm.xlu0 %225, %v210
        %v227 = vpop.permute.xlu0 %226
        %v229 = vperm.slane %v177, 2
        %v230 = vmul.f32 %v227, %v229
        %v231 = vadd.f32 %v224, %v230
        %232 = vset.pattern.permute.xlu0 3
        %233 = vperm.xlu0 %232, %v210
        %v234 = vpop.permute.xlu0 %233
        %v236 = vperm.slane %v177, 3
        %v237 = vmul.f32 %v234, %v236
        %v238 = vadd.f32 %v231, %v237
        %239 = vset.pattern.permute.xlu0 4
        %240 = vperm.xlu0 %239, %v210
        %v241 = vpop.permute.xlu0 %240
        %v243 = vperm.slane %v177, 4
        %v244 = vmul.f32 %v241, %v243
        %v245 = vadd.f32 %v238, %v244
        %246 = vset.pattern.permute.xlu0 5
        %247 = vperm.xlu0 %246, %v210
        %v248 = vpop.permute.xlu0 %247
        %v250 = vperm.slane %v177, 5
        %v251 = vmul.f32 %v248, %v250
        %v252 = vadd.f32 %v245, %v251
        %253 = vset.pattern.permute.xlu0 6
        %254 = vperm.xlu0 %253, %v210
        %v255 = vpop.permute.xlu0 %254
        %v257 = vperm.slane %v177, 6
        %v258 = vmul.f32 %v255, %v257
        %v259 = vadd.f32 %v252, %v258
        %260 = vset.pattern.permute.xlu0 7
        %261 = vperm.xlu0 %260, %v210
        %v262 = vpop.permute.xlu0 %261
        %v264 = vperm.slane %v177, 7
        %v265 = vmul.f32 %v262, %v264
        %v266 = vadd.f32 %v259, %v265
        %267 = vst [vmem:[%s175] sm:$0xff] %v266
        %s268 = sand.u32 %s75, 1
        %s269 = scalar_lea.sflag [#allocation4], %s268
        %s270 = sand.u32 %s75, 1
        %s271 = smul.addr %s270, 8
        %s272 = scalar_lea.vmem [#allocation7], %s271
        // Predicated region
        $region37: #{tpu_custom_call.1} parent=27 // pred_check
          %p273 = pneg %p85
        $region38: #{tpu_custom_call.1} parent=27 // pred_check_branch
          %275 = sbr.rel (%p273) target = $region40
        $region39: #{tpu_custom_call.1} parent=27 // pred_region
          %277 = vsyncadd %s269, 0
          %s278 = smul.addr %s20, 8
          %s279 = scalar_lea.hbm %s2, %s278
          %s281 = sshll.u32 %s272, 4
          %s282 = int_to_ptr.vmem [resolvable:$true] %s281
          %s283 = sshll.u32 %s279, 4
          %s284 = int_to_ptr.hbm [resolvable:$true] %s283
          %286 = dma.vmem_to_hbm [thread:$0]  %s282, 128, %s284, %s269
        $region40: #{tpu_custom_call.1} parent=27 // pred_fallthru
          _
      $region28: #{tpu_custom_call.1} parent=5 // pred_fallthru
        _
      %p287 = scmp.le.s32.totalorder 2, %s15
      // Predicated region
      $region41: #{tpu_custom_call.1} parent=5 // pred_check
        %p288 = pneg %p287
      $region42: #{tpu_custom_call.1} parent=5 // pred_check_branch
        %290 = sbr.rel (%p288) target = $region44
      $region43: #{tpu_custom_call.1} parent=5 // pred_region
        %s291 = ssub.s32 %s15, 2
        // Predicated region
        $region45: #{tpu_custom_call.1} parent=43 // pred_check
          %p292 = pneg %p91
        $region46: #{tpu_custom_call.1} parent=43 // pred_check_branch
          %294 = sbr.rel (%p292) target = $region48
        $region47: #{tpu_custom_call.1} parent=43 // pred_region
          %s295 = sand.u32 %s76, 1
          %s296 = scalar_lea.sflag [#allocation4], %s295
          %s297 = sand.u32 %s76, 1
          %s298 = smul.addr %s297, 8
          %s299 = scalar_lea.vmem [#allocation7], %s298
          %301 = dma.done %s296, 128
        $region48: #{tpu_custom_call.1} parent=43 // pred_fallthru
          _
      $region44: #{tpu_custom_call.1} parent=5 // pred_fallthru
        _
    $region6: #{tpu_custom_call.1} parent=1 // loop_footer
      %s19 = sadd.s32 1, %s15
    $region7: #{tpu_custom_call.1} parent=1 // loop_footer_branch
      %14 = sbr.rel target = $region3
    $region8: #{tpu_custom_call.1} parent=1 // loop_exit
      _
    %302 = vsyncpa [#allocation3], 1
    %s303 = scalar_lea.sflag [#allocation3], 1
    %304 = vsyncpa %s303, 1
    %305 = vsyncpa [#allocation6], 1
    %306 = vsyncpa [#allocation4], 1
    %s307 = scalar_lea.sflag [#allocation4], 1
    %308 = vsyncpa %s307, 1

</llo_original>
